<compile_context>
chip_gen: v7x
topology: tpu7x:2x2x1
jax: 0.10.0
libtpu: 0.0.40
codegen_flags: <defaults>
</compile_context>

<pallas_src>
import functools

import jax
import jax.numpy as jnp
from jax import lax
from jax.experimental import pallas as pl
from jax.experimental.pallas import tpu as pltpu

HIDDEN = 128   # fc1/fc2 width, fixed by the PyTorch module
LANE = 128     # TPU lane width


def _round_up(x, m):
    return (x + m - 1) // m * m


def _elu(v):
    # F.elu with alpha=1.0: x for x > 0 else exp(x) - 1 (EUP exp, hidden under HBM)
    return jnp.where(v > 0, v, jnp.exp(v) - 1.0)


def mdn_kernel(x_ref, w1_ref, b1_ref, w2_ref, b2_ref, wh_ref, bh_ref,
               out_ref, *, num_mixtures, output_dim):
    K = num_mixtures
    KD = num_mixtures * output_dim

    # fc1 + ELU  (MXU in bf16, f32 accumulate + f32 elementwise)
    x = x_ref[...].astype(jnp.bfloat16)
    h = jnp.dot(x, w1_ref[...], preferred_element_type=jnp.float32) + b1_ref[...]
    h = _elu(h)

    # fc2 + ELU
    h = jnp.dot(h.astype(jnp.bfloat16), w2_ref[...],
                preferred_element_type=jnp.float32) + b2_ref[...]
    h = _elu(h)

    # Fused heads: one lane-dense [tile_b, n_pad] matmul (pi | mu | sigma | pad).
    z = jnp.dot(h.astype(jnp.bfloat16), wh_ref[...],
                preferred_element_type=jnp.float32) + bh_ref[...]

    col = lax.broadcasted_iota(jnp.int32, z.shape, 1)
    is_pi = col < K
    is_sigma = (col >= K + KD) & (col < K + 2 * KD)

    # Masked softmax over the first K lanes only (stays lane-dense).
    logits = jnp.where(is_pi, z, -jnp.inf)
    m = jnp.max(logits, axis=-1, keepdims=True)
    e = jnp.exp(logits - m)                       # masked lanes -> exp(-inf) = 0
    denom = jnp.sum(e, axis=-1, keepdims=True)
    pi = e * pl.reciprocal(denom, approx=True)    # EUP vrcp slot (otherwise idle)

    # Single lane-dense bf16 store: [pi | mu | exp(sigma) | pad]
    slab = jnp.where(is_pi, pi, jnp.where(is_sigma, jnp.exp(z), z))
    out_ref[...] = slab.astype(out_ref.dtype)


def _choose_tile_b(batch, tile_b_max=4096):
    """Pick a batch tile: multiple of 8 sublanes, big enough to amortize the
    ~0.35us/step pipeline overhead, but >= 2 grid steps for large batches so
    both v7x TensorCores are occupied."""
    b8 = _round_up(batch, 8)
    if b8 <= 1024:
        return b8
    return min(tile_b_max, _round_up((b8 + 1) // 2, 8))


def mdn_forward(x, params, num_mixtures, output_dim, *, tile_b_max=4096,
                return_slab=False):
    B, input_dim = x.shape
    K, D = num_mixtures, output_dim
    KD = K * D
    n_heads = K + 2 * KD
    n_pad = _round_up(n_heads, LANE)

    tile_b = _choose_tile_b(B, tile_b_max)
    grid = (pl.cdiv(B, tile_b),)          # ragged last block handled by Pallas

    kernel = functools.partial(mdn_kernel, num_mixtures=K, output_dim=D)

    weight_bytes = ((input_dim * HIDDEN + HIDDEN * HIDDEN + HIDDEN * n_pad) * 2
                    + (2 * HIDDEN + n_pad) * 4)
    cost = pl.CostEstimate(
        flops=2 * B * (input_dim * HIDDEN + HIDDEN * HIDDEN + HIDDEN * n_pad),
        transcendentals=B * (2 * HIDDEN + 2 * n_pad + 1),
        bytes_accessed=B * input_dim * 4 + B * n_pad * 2 + weight_bytes,
    )

    out = pl.pallas_call(
        kernel,
        out_shape=jax.ShapeDtypeStruct((B, n_pad), jnp.bfloat16),
        grid=grid,
        in_specs=[
            pl.BlockSpec((tile_b, input_dim), lambda i: (i, 0)),   # x tile
            pl.BlockSpec((input_dim, HIDDEN), lambda i: (0, 0)),   # w1 (resident)
            pl.BlockSpec((1, HIDDEN), lambda i: (0, 0)),           # b1
            pl.BlockSpec((HIDDEN, HIDDEN), lambda i: (0, 0)),      # w2
            pl.BlockSpec((1, HIDDEN), lambda i: (0, 0)),           # b2
            pl.BlockSpec((HIDDEN, n_pad), lambda i: (0, 0)),       # fused heads W
            pl.BlockSpec((1, n_pad), lambda i: (0, 0)),            # fused heads b
        ],
        out_specs=pl.BlockSpec((tile_b, n_pad), lambda i: (i, 0)),
        compiler_params=pltpu.CompilerParams(
            dimension_semantics=("parallel",)),
        cost_estimate=cost,
    )(x, params["w1"], params["b1"], params["w2"], params["b2"],
      params["w_heads"], params["b_heads"])

    if return_slab:
        # Lane-dense [B, n_pad] bf16 slab = [pi | mu | sigma | pad]; consumers
        # that can read it directly avoid an extra HBM pass for the split below.
        return out

    pi = out[:, :K].astype(jnp.float32)
    mu = out[:, K:K + KD].astype(jnp.float32).reshape(B, K, D)
    sigma = out[:, K + KD:K + 2 * KD].astype(jnp.float32).reshape(B, K, D)
    return pi, mu, sigma


def init_params(key, input_dim, output_dim, num_mixtures, hidden=HIDDEN):
    """Deterministic synthetic params. Weights are [in, out] (transposed vs
    PyTorch nn.Linear), biases are [out]."""
    ks = jax.random.split(key, 10)
    K, D = num_mixtures, output_dim

    def lin(kw, kb, fan_in, fan_out):
        bound = 1.0 / jnp.sqrt(fan_in)
        w = jax.random.uniform(kw, (fan_in, fan_out), jnp.float32, -bound, bound)
        b = jax.random.uniform(kb, (fan_out,), jnp.float32, -bound, bound)
        return w, b

    w1, b1 = lin(ks[0], ks[1], input_dim, hidden)
    w2, b2 = lin(ks[2], ks[3], hidden, hidden)
    wpi, bpi = lin(ks[4], ks[5], hidden, K)
    wmu, bmu = lin(ks[6], ks[7], hidden, K * D)
    wsg, bsg = lin(ks[8], ks[9], hidden, K * D)
    return {"w1": w1, "b1": b1, "w2": w2, "b2": b2,
            "wpi": wpi, "bpi": bpi, "wmu": wmu, "bmu": bmu,
            "wsigma": wsg, "bsigma": bsg}


def prepare_params(raw, num_mixtures, output_dim):
    """One-time prep: fuse the three head linears into a single lane-dense
    [hidden, n_pad] matmul + [1, n_pad] bias, cast MXU operands to bf16."""
    K, D = num_mixtures, output_dim
    n_heads = K + 2 * K * D
    n_pad = _round_up(n_heads, LANE)

    w_heads = jnp.concatenate([raw["wpi"], raw["wmu"], raw["wsigma"]], axis=1)
    b_heads = jnp.concatenate([raw["bpi"], raw["bmu"], raw["bsigma"]], axis=0)
    w_heads = jnp.pad(w_heads, ((0, 0), (0, n_pad - n_heads)))
    b_heads = jnp.pad(b_heads, ((0, n_pad - n_heads),))

    return {
        "w1": raw["w1"].astype(jnp.bfloat16),
        "b1": raw["b1"].reshape(1, -1),
        "w2": raw["w2"].astype(jnp.bfloat16),
        "b2": raw["b2"].reshape(1, -1),
        "w_heads": w_heads.astype(jnp.bfloat16),
        "b_heads": b_heads.reshape(1, -1),
    }


if __name__ == "__main__":
    input_dim = 32
    output_dim = 4
    num_mixtures = 8
    batch = 8

    key = jax.random.PRNGKey(0)
    kx, kp = jax.random.split(key)
    x = jax.random.normal(kx, (batch, input_dim), jnp.float32)
    raw = init_params(kp, input_dim, output_dim, num_mixtures)
    params = prepare_params(raw, num_mixtures, output_dim)

    fwd = jax.jit(functools.partial(
        mdn_forward, num_mixtures=num_mixtures, output_dim=output_dim))
    pi, mu, sigma = fwd(x, params)
    jax.block_until_ready((pi, mu, sigma))

    assert pi.shape == (batch, num_mixtures)
    assert mu.shape == (batch, num_mixtures, output_dim)
    assert sigma.shape == (batch, num_mixtures, output_dim)

    # Pure-JAX f32 reference (loose tolerance: bf16 MXU/slab + approx reciprocal).
    h = jax.nn.elu(x @ raw["w1"] + raw["b1"])
    h = jax.nn.elu(h @ raw["w2"] + raw["b2"])
    rpi = jax.nn.softmax(h @ raw["wpi"] + raw["bpi"], axis=-1)
    rmu = (h @ raw["wmu"] + raw["bmu"]).reshape(-1, num_mixtures, output_dim)
    rsg = jnp.exp(h @ raw["wsigma"] + raw["bsigma"]).reshape(
        -1, num_mixtures, output_dim)
    assert bool(jnp.allclose(pi, rpi, rtol=5e-2, atol=2e-2))
    assert bool(jnp.allclose(mu, rmu, rtol=5e-2, atol=2e-2))
    assert bool(jnp.allclose(sigma, rsg, rtol=5e-2, atol=2e-2))

    print("KERNEL_OK")
</pallas_src>

<mosaic_0001>
module attributes {stable_mosaic.version = 11 : i64} {
  func.func @mdn_kernel(%arg0: i32, %arg1: memref<8x32xf32, #tpu.memory_space<vmem>>, %arg2: memref<32x128xbf16, #tpu.memory_space<vmem>>, %arg3: memref<1x128xf32, #tpu.memory_space<vmem>>, %arg4: memref<128x128xbf16, #tpu.memory_space<vmem>>, %arg5: memref<1x128xf32, #tpu.memory_space<vmem>>, %arg6: memref<128x128xbf16, #tpu.memory_space<vmem>>, %arg7: memref<1x128xf32, #tpu.memory_space<vmem>>, %arg8: memref<8x128xbf16, #tpu.memory_space<vmem>>) attributes {dimension_semantics = [#tpu.dimension_semantics<parallel>], iteration_bounds = array<i64: 1>, scalar_prefetch = 0 : i64, scratch_operands = 0 : i64, tpu.core_type = #tpu.core_type<tc>, window_params = [{transform_indices = @transform_0, window_bounds = array<i64: 8, 32>}, {pipeline_mode = #tpu.pipeline_mode<synchronous>, transform_indices = @transform_1, window_bounds = array<i64: 32, 128>}, {pipeline_mode = #tpu.pipeline_mode<synchronous>, transform_indices = @transform_2, window_bounds = array<i64: 1, 128>}, {pipeline_mode = #tpu.pipeline_mode<synchronous>, transform_indices = @transform_3, window_bounds = array<i64: 128, 128>}, {pipeline_mode = #tpu.pipeline_mode<synchronous>, transform_indices = @transform_4, window_bounds = array<i64: 1, 128>}, {pipeline_mode = #tpu.pipeline_mode<synchronous>, transform_indices = @transform_5, window_bounds = array<i64: 128, 128>}, {pipeline_mode = #tpu.pipeline_mode<synchronous>, transform_indices = @transform_6, window_bounds = array<i64: 1, 128>}, {transform_indices = @transform_7, window_bounds = array<i64: 8, 128>}]} {
    %c0 = arith.constant 0 : index
    %c0_0 = arith.constant 0 : index
    %0 = vector.load %arg1[%c0, %c0_0] : memref<8x32xf32, #tpu.memory_space<vmem>>, vector<8x32xf32>
    %1 = arith.truncf %0 : vector<8x32xf32> to vector<8x32xbf16>
    %c0_1 = arith.constant 0 : index
    %c0_2 = arith.constant 0 : index
    %2 = vector.load %arg2[%c0_1, %c0_2] : memref<32x128xbf16, #tpu.memory_space<vmem>>, vector<32x128xbf16>
    %cst = arith.constant dense<0.000000e+00> : vector<8x128xf32>
    %3 = tpu.matmul %1, %2, %cst {dimension_numbers = #tpu.dot_dimension_numbers<[1], [0], [0], [1], [0, 0, 1, 1], [], []>} : vector<8x32xbf16>, vector<32x128xbf16>, vector<8x128xf32> -> vector<8x128xf32>
    %c0_3 = arith.constant 0 : index
    %c0_4 = arith.constant 0 : index
    %4 = vector.load %arg3[%c0_3, %c0_4] : memref<1x128xf32, #tpu.memory_space<vmem>>, vector<1x128xf32>
    %5 = vector.broadcast %4 : vector<1x128xf32> to vector<8x128xf32>
    %6 = arith.addf %3, %5 : vector<8x128xf32>
    %cst_5 = arith.constant 0.000000e+00 : f32
    %7 = vector.broadcast %cst_5 : f32 to vector<8x128xf32>
    %8 = arith.cmpf ogt, %6, %7 : vector<8x128xf32>
    %9 = math.exp %6 : vector<8x128xf32>
    %cst_6 = arith.constant 1.000000e+00 : f32
    %10 = vector.broadcast %cst_6 : f32 to vector<8x128xf32>
    %11 = arith.subf %9, %10 : vector<8x128xf32>
    %12 = arith.select %8, %6, %11 : vector<8x128xi1>, vector<8x128xf32>
    %13 = arith.truncf %12 : vector<8x128xf32> to vector<8x128xbf16>
    %c0_7 = arith.constant 0 : index
    %c0_8 = arith.constant 0 : index
    %14 = vector.load %arg4[%c0_7, %c0_8] : memref<128x128xbf16, #tpu.memory_space<vmem>>, vector<128x128xbf16>
    %cst_9 = arith.constant dense<0.000000e+00> : vector<8x128xf32>
    %15 = tpu.matmul %13, %14, %cst_9 {dimension_numbers = #tpu.dot_dimension_numbers<[1], [0], [0], [1], [0, 0, 1, 1], [], []>} : vector<8x128xbf16>, vector<128x128xbf16>, vector<8x128xf32> -> vector<8x128xf32>
    %c0_10 = arith.constant 0 : index
    %c0_11 = arith.constant 0 : index
    %16 = vector.load %arg5[%c0_10, %c0_11] : memref<1x128xf32, #tpu.memory_space<vmem>>, vector<1x128xf32>
    %17 = vector.broadcast %16 : vector<1x128xf32> to vector<8x128xf32>
    %18 = arith.addf %15, %17 : vector<8x128xf32>
    %cst_12 = arith.constant 0.000000e+00 : f32
    %19 = vector.broadcast %cst_12 : f32 to vector<8x128xf32>
    %20 = arith.cmpf ogt, %18, %19 : vector<8x128xf32>
    %21 = math.exp %18 : vector<8x128xf32>
    %cst_13 = arith.constant 1.000000e+00 : f32
    %22 = vector.broadcast %cst_13 : f32 to vector<8x128xf32>
    %23 = arith.subf %21, %22 : vector<8x128xf32>
    %24 = arith.select %20, %18, %23 : vector<8x128xi1>, vector<8x128xf32>
    %25 = arith.truncf %24 : vector<8x128xf32> to vector<8x128xbf16>
    %c0_14 = arith.constant 0 : index
    %c0_15 = arith.constant 0 : index
    %26 = vector.load %arg6[%c0_14, %c0_15] : memref<128x128xbf16, #tpu.memory_space<vmem>>, vector<128x128xbf16>
    %cst_16 = arith.constant dense<0.000000e+00> : vector<8x128xf32>
    %27 = tpu.matmul %25, %26, %cst_16 {dimension_numbers = #tpu.dot_dimension_numbers<[1], [0], [0], [1], [0, 0, 1, 1], [], []>} : vector<8x128xbf16>, vector<128x128xbf16>, vector<8x128xf32> -> vector<8x128xf32>
    %c0_17 = arith.constant 0 : index
    %c0_18 = arith.constant 0 : index
    %28 = vector.load %arg7[%c0_17, %c0_18] : memref<1x128xf32, #tpu.memory_space<vmem>>, vector<1x128xf32>
    %29 = vector.broadcast %28 : vector<1x128xf32> to vector<8x128xf32>
    %30 = arith.addf %27, %29 : vector<8x128xf32>
    %31 = tpu.iota {dimensions = array<i32: 1>} : vector<8x128xi32>
    %c8_i32 = arith.constant 8 : i32
    %32 = vector.broadcast %c8_i32 : i32 to vector<8x128xi32>
    %33 = arith.cmpi slt, %31, %32 : vector<8x128xi32>
    %c40_i32 = arith.constant 40 : i32
    %34 = vector.broadcast %c40_i32 : i32 to vector<8x128xi32>
    %35 = arith.cmpi sge, %31, %34 : vector<8x128xi32>
    %c72_i32 = arith.constant 72 : i32
    %36 = vector.broadcast %c72_i32 : i32 to vector<8x128xi32>
    %37 = arith.cmpi slt, %31, %36 : vector<8x128xi32>
    %38 = arith.andi %35, %37 : vector<8x128xi1>
    %cst_19 = arith.constant 0xFF800000 : f32
    %39 = vector.broadcast %cst_19 : f32 to vector<8x128xf32>
    %40 = arith.select %33, %30, %39 : vector<8x128xi1>, vector<8x128xf32>
    %cst_20 = arith.constant dense<0xFF800000> : vector<8xf32>
    %41 = vector.multi_reduction <maximumf>, %40, %cst_20 [1] : vector<8x128xf32> to vector<8xf32>
    %42 = vector.shape_cast %41 : vector<8xf32> to vector<8x1xf32>
    %43 = vector.broadcast %42 : vector<8x1xf32> to vector<8x128xf32>
    %44 = arith.subf %40, %43 : vector<8x128xf32>
    %45 = math.exp %44 : vector<8x128xf32>
    %cst_21 = arith.constant dense<0.000000e+00> : vector<8xf32>
    %46 = vector.multi_reduction <add>, %45, %cst_21 [1] : vector<8x128xf32> to vector<8xf32>
    %47 = vector.shape_cast %46 : vector<8xf32> to vector<8x1xf32>
    %48 = tpu.reciprocal %47 {approx = true} : vector<8x1xf32> -> vector<8x1xf32>
    %49 = vector.broadcast %48 : vector<8x1xf32> to vector<8x128xf32>
    %50 = arith.mulf %45, %49 : vector<8x128xf32>
    %51 = math.exp %30 : vector<8x128xf32>
    %52 = arith.select %38, %51, %30 : vector<8x128xi1>, vector<8x128xf32>
    %53 = arith.select %33, %50, %52 : vector<8x128xi1>, vector<8x128xf32>
    %54 = arith.truncf %53 : vector<8x128xf32> to vector<8x128xbf16>
    %c0_22 = arith.constant 0 : index
    %c0_23 = arith.constant 0 : index
    %55 = vector.load %arg8[%c0_22, %c0_23] : memref<8x128xbf16, #tpu.memory_space<vmem>>, vector<8x128xbf16>
    tpu.vector_store %arg8[%c0_22, %c0_23], %54 {strides = array<i32>} : memref<8x128xbf16, #tpu.memory_space<vmem>>, vector<8x128xbf16>,
    return
  }
  func.func @transform_0(%arg0: i32) -> (i32, i32) {
    %c0_i32 = arith.constant 0 : i32
    %c0_i32_0 = arith.constant 0 : i32
    return %arg0, %c0_i32 : i32, i32
  }
  func.func @transform_1(%arg0: i32) -> (i32, i32) {
    %c0_i32 = arith.constant 0 : i32
    %c0_i32_0 = arith.constant 0 : i32
    %c0_i32_1 = arith.constant 0 : i32
    return %c0_i32, %c0_i32_0 : i32, i32
  }
  func.func @transform_2(%arg0: i32) -> (i32, i32) {
    %c0_i32 = arith.constant 0 : i32
    %c0_i32_0 = arith.constant 0 : i32
    %c0_i32_1 = arith.constant 0 : i32
    return %c0_i32, %c0_i32_0 : i32, i32
  }
  func.func @transform_3(%arg0: i32) -> (i32, i32) {
    %c0_i32 = arith.constant 0 : i32
    %c0_i32_0 = arith.constant 0 : i32
    %c0_i32_1 = arith.constant 0 : i32
    return %c0_i32, %c0_i32_0 : i32, i32
  }
  func.func @transform_4(%arg0: i32) -> (i32, i32) {
    %c0_i32 = arith.constant 0 : i32
    %c0_i32_0 = arith.constant 0 : i32
    %c0_i32_1 = arith.constant 0 : i32
    return %c0_i32, %c0_i32_0 : i32, i32
  }
  func.func @transform_5(%arg0: i32) -> (i32, i32) {
    %c0_i32 = arith.constant 0 : i32
    %c0_i32_0 = arith.constant 0 : i32
    %c0_i32_1 = arith.constant 0 : i32
    return %c0_i32, %c0_i32_0 : i32, i32
  }
  func.func @transform_6(%arg0: i32) -> (i32, i32) {
    %c0_i32 = arith.constant 0 : i32
    %c0_i32_0 = arith.constant 0 : i32
    %c0_i32_1 = arith.constant 0 : i32
    return %c0_i32, %c0_i32_0 : i32, i32
  }
  func.func @transform_7(%arg0: i32) -> (i32, i32) {
    %c0_i32 = arith.constant 0 : i32
    %c0_i32_0 = arith.constant 0 : i32
    return %arg0, %c0_i32 : i32, i32
  }
}

</mosaic_0001>

<llo_original>
// kernel: mdn_forward.1
$region0: #{mdn_forward.1}
  #allocation0 [shape = 'u32[]', space=smem, size = 0x4, offset = 0x4, fixed_abs, tag = 'smem constant byte address 0x4 - core index']
  #allocation1 [shape = 'u32[144,128]{1,0:T(1,128)}', space=vmem, size = 0x12000, scoped, tag = 'internal scratch']
  %s0 = inlined_call_operand.hbm [shape: f32[8,32], index: 0, kind: input, shape index: {}]
  %s1 = inlined_call_operand.hbm [shape: bf16[32,128], index: 1, kind: input, shape index: {}]
  %s2 = inlined_call_operand.vmem [shape: f32[1,128], index: 2, kind: input, shape index: {}]
  %s3 = inlined_call_operand.hbm [shape: bf16[128,128], index: 3, kind: input, shape index: {}]
  %s4 = inlined_call_operand.vmem [shape: f32[1,128], index: 4, kind: input, shape index: {}]
  %s5 = inlined_call_operand.hbm [shape: bf16[128,128], index: 5, kind: input, shape index: {}]
  %s6 = inlined_call_operand.vmem [shape: f32[1,128], index: 6, kind: input, shape index: {}]
  %s7 = inlined_call_operand.vmem [shape: bf16[8,128], index: 7, kind: output, shape index: {}]
  %s8 = sld [smem:[#allocation0]]
  $region54: #{mdn_forward.1} parent=0
    _
  %s10 = ssub.s32 1, %s8
  %s11 = scalar_select 0, %s10, %s8
  $region1: #{mdn_forward.1} parent=0
    #allocation2 [shape = 'u8[4096]{0}', space=vmem, size = 0x1000, scoped, tag = 'input window, operand 0, single buffered']
    #allocation3 [shape = 's32[1]{0}', space=sflag, size = 0x4, scoped, tag = 'scoped memory for mdn_forward.1']
    #allocation4 [shape = 'u8[8192]{0}', space=vmem, size = 0x2000, scoped, tag = 'input window, operand 1, single buffered']
    #allocation5 [shape = 's32[1]{0}', space=sflag, size = 0x4, scoped, tag = 'scoped memory for mdn_forward.1']
    #allocation6 [shape = 'u8[32768]{0}', space=vmem, size = 0x8000, scoped, tag = 'input window, operand 3, single buffered']
    #allocation7 [shape = 'u8[32768]{0}', space=vmem, size = 0x8000, scoped, tag = 'input window, operand 5, single buffered']
    #allocation8 [shape = 's32[1]{0}', space=sflag, size = 0x4, scoped, tag = 'scoped memory for mdn_forward.1']
    %12 = vsyncpa [#allocation3], 0
    %13 = vsyncpa [#allocation5], 0
    %14 = vsyncpa [#allocation8], 0
    // Predicated region
    $region2: #{mdn_forward.1} parent=1 // pred_check
      _
    $region3: #{mdn_forward.1} parent=1 // pred_check_branch
      %16 = sbr.rel (0) target = $region5
    $region4: #{mdn_forward.1} parent=1 // pred_region
      %s18 = ssub.s32 128, 128
      %19 = vsyncadd [#allocation3], %s18
      %s21 = sshll.u32 [#allocation2], 4
      %s22 = int_to_ptr.vmem [resolvable:$true] %s21
      %24 = dma.hbm_to_vmem [thread:$0]  %s0, 128, %s22, [#allocation3]
    $region5: #{mdn_forward.1} parent=1 // pred_fallthru
      _
    // Predicated region
    $region6: #{mdn_forward.1} parent=1 // pred_check
      _
    $region7: #{mdn_forward.1} parent=1 // pred_check_branch
      %26 = sbr.rel (0) target = $region9
    $region8: #{mdn_forward.1} parent=1 // pred_region
      %s28 = ssub.s32 256, 256
      %29 = vsyncadd [#allocation5], %s28
      %s30 = sshll.u32 [#allocation4], 4
      %s31 = int_to_ptr.vmem [resolvable:$true] %s30
      %36 = dma.hbm_to_vmem [thread:$0]  %s1, 256, %s31, [#allocation5], 64, 64, 4
    $region9: #{mdn_forward.1} parent=1 // pred_fallthru
      _
    // Predicated region
    $region10: #{mdn_forward.1} parent=1 // pred_check
      _
    $region11: #{mdn_forward.1} parent=1 // pred_check_branch
      %38 = sbr.rel (0) target = $region13
    $region12: #{mdn_forward.1} parent=1 // pred_region
      _
    $region13: #{mdn_forward.1} parent=1 // pred_fallthru
      _
    // Predicated region
    $region14: #{mdn_forward.1} parent=1 // pred_check
      _
    $region15: #{mdn_forward.1} parent=1 // pred_check_branch
      %40 = sbr.rel (0) target = $region17
    $region16: #{mdn_forward.1} parent=1 // pred_region
      %s42 = ssub.s32 1024, 1024
      %43 = vsyncadd [#allocation5], %s42
      %s44 = sshll.u32 [#allocation6], 4
      %s45 = int_to_ptr.vmem [resolvable:$true] %s44
      %50 = dma.hbm_to_vmem [thread:$0]  %s3, 1024, %s45, [#allocation5], 64, 64, 4
    $region17: #{mdn_forward.1} parent=1 // pred_fallthru
      _
    // Predicated region
    $region18: #{mdn_forward.1} parent=1 // pred_check
      _
    $region19: #{mdn_forward.1} parent=1 // pred_check_branch
      %52 = sbr.rel (0) target = $region21
    $region20: #{mdn_forward.1} parent=1 // pred_region
      _
    $region21: #{mdn_forward.1} parent=1 // pred_fallthru
      _
    // Predicated region
    $region22: #{mdn_forward.1} parent=1 // pred_check
      _
    $region23: #{mdn_forward.1} parent=1 // pred_check_branch
      %54 = sbr.rel (0) target = $region25
    $region24: #{mdn_forward.1} parent=1 // pred_region
      %s56 = ssub.s32 1024, 1024
      %57 = vsyncadd [#allocation8], %s56
      %s58 = sshll.u32 [#allocation7], 4
      %s59 = int_to_ptr.vmem [resolvable:$true] %s58
      %64 = dma.hbm_to_vmem [thread:$0]  %s5, 1024, %s59, [#allocation8], 64, 64, 4
    $region25: #{mdn_forward.1} parent=1 // pred_fallthru
      _
    // Predicated region
    $region26: #{mdn_forward.1} parent=1 // pred_check
      _
    $region27: #{mdn_forward.1} parent=1 // pred_check_branch
      %66 = sbr.rel (0) target = $region29
    $region28: #{mdn_forward.1} parent=1 // pred_region
      _
    $region29: #{mdn_forward.1} parent=1 // pred_fallthru
      _
    // Predicated region
    $region30: #{mdn_forward.1} parent=1 // pred_check
      _
    $region31: #{mdn_forward.1} parent=1 // pred_check_branch
      %68 = sbr.rel (0) target = $region33
    $region32: #{mdn_forward.1} parent=1 // pred_region
      %69 = dma.done [#allocation3], 128
    $region33: #{mdn_forward.1} parent=1 // pred_fallthru
      _
    // Predicated region
    $region34: #{mdn_forward.1} parent=1 // pred_check
      _
    $region35: #{mdn_forward.1} parent=1 // pred_check_branch
      %71 = sbr.rel (0) target = $region37
    $region36: #{mdn_forward.1} parent=1 // pred_region
      %72 = dma.done [#allocation5], 256
    $region37: #{mdn_forward.1} parent=1 // pred_fallthru
      _
    // Predicated region
    $region38: #{mdn_forward.1} parent=1 // pred_check
      _
    $region39: #{mdn_forward.1} parent=1 // pred_check_branch
      %74 = sbr.rel (0) target = $region41
    $region40: #{mdn_forward.1} parent=1 // pred_region
      %75 = dma.done [#allocation5], 1024
    $region41: #{mdn_forward.1} parent=1 // pred_fallthru
      _
    // Predicated region
    $region42: #{mdn_forward.1} parent=1 // pred_check
      _
    $region43: #{mdn_forward.1} parent=1 // pred_check_branch
      %77 = sbr.rel (0) target = $region45
    $region44: #{mdn_forward.1} parent=1 // pred_region
      %78 = dma.done [#allocation8], 1024
    $region45: #{mdn_forward.1} parent=1 // pred_fallthru
      _
    %v80 = vld [vmem:[#allocation2] sm:$0xff]
    %v81 = vpack.c.bf16 %v80, %v80
    %v82 = vld [vmem:[#allocation4] sm:$0xf]
    %v83 = vld [vmem:[#allocation4 + $0x4] sm:$0xf]
    %v84 = vld [vmem:[#allocation4 + $0x8] sm:$0xf]
    %v85 = vld [vmem:[#allocation4 + $0xc] sm:$0xf]
    %v86 = vld [vmem:[%s2] sm:$0x1]
    %v88 = vlaneseq
    %v89 = vshrl.u32 %v88, 7
    %v90 = vsub.s32 0, %v89
    %v91 = vrot.slane %v86, %v90
    %v97 = vunpack.c.l.b16 %v82
    %v98 = vunpack.c.l.b16 %v83
    %v99 = vunpack.c.l.b16 %v84
    %v100 = vunpack.c.l.b16 %v85
    %v101 = vpack.c.b16 %v98, %v97
    %v102 = vpack.c.b16 %v100, %v99
    %vm105 = vcmask 261120
    %v107 = vsel %vm105, %v81, 0
    %109 = vmatprep.subr.bf16.mxu0 0
    %110 = vmatpush1.bf16.msra.mxu0 %v101
    %111 = vmatprep.subr.bf16.mxu0 0
    %112 = vmatpush1.bf16.msra.mxu0 %v102
    %113 = vmatprep.subr.bf16.mxu0 0
    %114 = vmatpush1.bf16.msra.mxu0 0
    %115 = vmatprep.subr.bf16.mxu0 0
    %116 = vmatpush1.bf16.msra.mxu0 0
    %117 = vmatprep.subr.bf16.mxu0 0
    %118 = vmatpush1.bf16.msra.mxu0 0
    %119 = vmatprep.subr.bf16.mxu0 0
    %120 = vmatpush1.bf16.msra.mxu0 0
    %121 = vmatprep.subr.bf16.mxu0 0
    %122 = vmatpush1.bf16.msra.mxu0 0
    %123 = vmatprep.subr.bf16.mxu0 0
    %124 = vmatpush1.bf16.msra.mxu0 0
    %125 = vmatprep.subr.bf16.mxu0 0
    %126 = vmatpush1.bf16.msra.mxu0 0
    %127 = vmatprep.subr.bf16.mxu0 0
    %128 = vmatpush1.bf16.msra.mxu0 0
    %129 = vmatprep.subr.bf16.mxu0 0
    %130 = vmatpush1.bf16.msra.mxu0 0
    %131 = vmatprep.subr.bf16.mxu0 0
    %132 = vmatpush1.bf16.msra.mxu0 0
    %133 = vmatprep.subr.bf16.mxu0 0
    %134 = vmatpush1.bf16.msra.mxu0 0
    %135 = vmatprep.subr.bf16.mxu0 0
    %136 = vmatpush1.bf16.msra.mxu0 0
    %137 = vmatprep.subr.bf16.mxu0 0
    %138 = vmatpush1.bf16.msra.mxu0 0
    %139 = vmatprep.subr.bf16.mxu0 0
    %140 = vmatpush1.bf16.msra.mxu0 0
    %141 = vmatprep.mubr.bf16.mxu0 0
    %142 = vmatmul.mubr.bf16.gmra.mrb[0].mxu0 %v107
    %v143 = vpop.f32.mrb[0].mxu0
    %v144 = vadd.f32 %v91, %v143
    %v145 = vpop.f32.mrb[0].mxu0
    %v146 = vpop.f32.mrb[0].mxu0
    %v147 = vpop.f32.mrb[0].mxu0
    %148 = vdwg.mxu0
    %vm149 = vcmp.gt.f32.partialorder %v144, 0.0
    %v150 = vmul.f32 %v144, 1.442695
    %v151 = vpow.pop %v150
    %v152 = vsub.f32 %v151, 1.0
    %v153 = vsel %vm149, %v144, %v152
    %v154 = vpack.c.bf16 %v153, %v153
    %v155 = vld [vmem:[#allocation6] sm:$0xf]
    %v156 = vld [vmem:[#allocation6 + $0x4] sm:$0xf]
    %v157 = vld [vmem:[#allocation6 + $0x8] sm:$0xf]
    %v158 = vld [vmem:[#allocation6 + $0xc] sm:$0xf]
    %v159 = vld [vmem:[#allocation6 + $0x10] sm:$0xf]
    %v160 = vld [vmem:[#allocation6 + $0x14] sm:$0xf]
    %v161 = vld [vmem:[#allocation6 + $0x18] sm:$0xf]
    %v162 = vld [vmem:[#allocation6 + $0x1c] sm:$0xf]
    %v163 = vld [vmem:[#allocation6 + $0x20] sm:$0xf]
    %v164 = vld [vmem:[#allocation6 + $0x24] sm:$0xf]
    %v165 = vld [vmem:[#allocation6 + $0x28] sm:$0xf]
    %v166 = vld [vmem:[#allocation6 + $0x2c] sm:$0xf]
    %v167 = vld [vmem:[#allocation6 + $0x30] sm:$0xf]
    %v168 = vld [vmem:[#allocation6 + $0x34] sm:$0xf]
    %v169 = vld [vmem:[#allocation6 + $0x38] sm:$0xf]
    %v170 = vld [vmem:[#allocation6 + $0x3c] sm:$0xf]
    %v171 = vld [vmem:[%s4] sm:$0x1]
    %v173 = vlaneseq
    %v174 = vshrl.u32 %v173, 7
    %v175 = vsub.s32 0, %v174
    %v176 = vrot.slane %v171, %v175
    %v194 = vunpack.c.l.b16 %v155
    %v195 = vunpack.c.l.b16 %v156
    %v196 = vunpack.c.l.b16 %v157
    %v197 = vunpack.c.l.b16 %v158
    %v198 = vunpack.c.l.b16 %v159
    %v199 = vunpack.c.l.b16 %v160
    %v200 = vunpack.c.l.b16 %v161
    %v201 = vunpack.c.l.b16 %v162
    %v202 = vunpack.c.l.b16 %v163
    %v203 = vunpack.c.l.b16 %v164
    %v204 = vunpack.c.l.b16 %v165
    %v205 = vunpack.c.l.b16 %v166
    %v206 = vunpack.c.l.b16 %v167
    %v207 = vunpack.c.l.b16 %v168
    %v208 = vunpack.c.l.b16 %v169
    %v209 = vunpack.c.l.b16 %v170
    %v210 = vpack.c.b16 %v195, %v194
    %v211 = vpack.c.b16 %v197, %v196
    %v212 = vpack.c.b16 %v199, %v198
    %v213 = vpack.c.b16 %v201, %v200
    %v214 = vpack.c.b16 %v203, %v202
    %v215 = vpack.c.b16 %v205, %v204
    %v216 = vpack.c.b16 %v207, %v206
    %v217 = vpack.c.b16 %v209, %v208
    %226 = vmatprep.subr.bf16.mxu0 0
    %227 = vmatpush1.bf16.msra.mxu0 %v210
    %228 = vmatprep.subr.bf16.mxu0 0
    %229 = vmatpush1.bf16.msra.mxu0 %v211
    %230 = vmatprep.subr.bf16.mxu0 0
    %231 = vmatpush1.bf16.msra.mxu0 %v212
    %232 = vmatprep.subr.bf16.mxu0 0
    %233 = vmatpush1.bf16.msra.mxu0 %v213
    %234 = vmatprep.subr.bf16.mxu0 0
    %235 = vmatpush1.bf16.msra.mxu0 %v214
    %236 = vmatprep.subr.bf16.mxu0 0
    %237 = vmatpush1.bf16.msra.mxu0 %v215
    %238 = vmatprep.subr.bf16.mxu0 0
    %239 = vmatpush1.bf16.msra.mxu0 %v216
    %240 = vmatprep.subr.bf16.mxu0 0
    %241 = vmatpush1.bf16.msra.mxu0 %v217
    %242 = vmatprep.subr.bf16.mxu0 0
    %243 = vmatpush1.bf16.msra.mxu0 0
    %244 = vmatprep.subr.bf16.mxu0 0
    %245 = vmatpush1.bf16.msra.mxu0 0
    %246 = vmatprep.subr.bf16.mxu0 0
    %247 = vmatpush1.bf16.msra.mxu0 0
    %248 = vmatprep.subr.bf16.mxu0 0
    %249 = vmatpush1.bf16.msra.mxu0 0
    %250 = vmatprep.subr.bf16.mxu0 0
    %251 = vmatpush1.bf16.msra.mxu0 0
    %252 = vmatprep.subr.bf16.mxu0 0
    %253 = vmatpush1.bf16.msra.mxu0 0
    %254 = vmatprep.subr.bf16.mxu0 0
    %255 = vmatpush1.bf16.msra.mxu0 0
    %256 = vmatprep.subr.bf16.mxu0 0
    %257 = vmatpush1.bf16.msra.mxu0 0
    %258 = vmatprep.mubr.bf16.mxu0 0
    %259 = vmatmul.mubr.bf16.gmra.mrb[0].mxu0 %v154
    %v260 = vpop.f32.mrb[0].mxu0
    %v261 = vadd.f32 %v176, %v260
    %v262 = vpop.f32.mrb[0].mxu0
    %v263 = vpop.f32.mrb[0].mxu0
    %v264 = vpop.f32.mrb[0].mxu0
    %265 = vdwg.mxu0
    %vm266 = vcmp.gt.f32.partialorder %v261, 0.0
    %v267 = vmul.f32 %v261, 1.442695
    %v268 = vpow.pop %v267
    %v269 = vsub.f32 %v268, 1.0
    %v270 = vsel %vm266, %v261, %v269
    %v271 = vpack.c.bf16 %v270, %v270
    %v272 = vld [vmem:[#allocation7] sm:$0xf]
    %v273 = vld [vmem:[#allocation7 + $0x4] sm:$0xf]
    %v274 = vld [vmem:[#allocation7 + $0x8] sm:$0xf]
    %v275 = vld [vmem:[#allocation7 + $0xc] sm:$0xf]
    %v276 = vld [vmem:[#allocation7 + $0x10] sm:$0xf]
    %v277 = vld [vmem:[#allocation7 + $0x14] sm:$0xf]
    %v278 = vld [vmem:[#allocation7 + $0x18] sm:$0xf]
    %v279 = vld [vmem:[#allocation7 + $0x1c] sm:$0xf]
    %v280 = vld [vmem:[#allocation7 + $0x20] sm:$0xf]
    %v281 = vld [vmem:[#allocation7 + $0x24] sm:$0xf]
    %v282 = vld [vmem:[#allocation7 + $0x28] sm:$0xf]
    %v283 = vld [vmem:[#allocation7 + $0x2c] sm:$0xf]
    %v284 = vld [vmem:[#allocation7 + $0x30] sm:$0xf]
    %v285 = vld [vmem:[#allocation7 + $0x34] sm:$0xf]
    %v286 = vld [vmem:[#allocation7 + $0x38] sm:$0xf]
    %v287 = vld [vmem:[#allocation7 + $0x3c] sm:$0xf]
    %v288 = vld [vmem:[%s6] sm:$0x1]
    %v290 = vlaneseq
    %v291 = vshrl.u32 %v290, 7
    %v292 = vsub.s32 0, %v291
    %v293 = vrot.slane %v288, %v292
    %v311 = vunpack.c.l.b16 %v272
    %v312 = vunpack.c.l.b16 %v273
    %v313 = vunpack.c.l.b16 %v274
    %v314 = vunpack.c.l.b16 %v275
    %v315 = vunpack.c.l.b16 %v276
    %v316 = vunpack.c.l.b16 %v277
    %v317 = vunpack.c.l.b16 %v278
    %v318 = vunpack.c.l.b16 %v279
    %v319 = vunpack.c.l.b16 %v280
    %v320 = vunpack.c.l.b16 %v281
    %v321 = vunpack.c.l.b16 %v282
    %v322 = vunpack.c.l.b16 %v283
    %v323 = vunpack.c.l.b16 %v284
    %v324 = vunpack.c.l.b16 %v285
    %v325 = vunpack.c.l.b16 %v286
    %v326 = vunpack.c.l.b16 %v287
    %v327 = vpack.c.b16 %v312, %v311
    %v328 = vpack.c.b16 %v314, %v313
    %v329 = vpack.c.b16 %v316, %v315
    %v330 = vpack.c.b16 %v318, %v317
    %v331 = vpack.c.b16 %v320, %v319
    %v332 = vpack.c.b16 %v322, %v321
    %v333 = vpack.c.b16 %v324, %v323
    %v334 = vpack.c.b16 %v326, %v325
    %343 = vmatprep.subr.bf16.mxu0 0
    %344 = vmatpush1.bf16.msra.mxu0 %v327
    %345 = vmatprep.subr.bf16.mxu0 0
    %346 = vmatpush1.bf16.msra.mxu0 %v328
    %347 = vmatprep.subr.bf16.mxu0 0
    %348 = vmatpush1.bf16.msra.mxu0 %v329
    %349 = vmatprep.subr.bf16.mxu0 0
    %350 = vmatpush1.bf16.msra.mxu0 %v330
    %351 = vmatprep.subr.bf16.mxu0 0
    %352 = vmatpush1.bf16.msra.mxu0 %v331
    %353 = vmatprep.subr.bf16.mxu0 0
    %354 = vmatpush1.bf16.msra.mxu0 %v332
    %355 = vmatprep.subr.bf16.mxu0 0
    %356 = vmatpush1.bf16.msra.mxu0 %v333
    %357 = vmatprep.subr.bf16.mxu0 0
    %358 = vmatpush1.bf16.msra.mxu0 %v334
    %359 = vmatprep.subr.bf16.mxu0 0
    %360 = vmatpush1.bf16.msra.mxu0 0
    %361 = vmatprep.subr.bf16.mxu0 0
    %362 = vmatpush1.bf16.msra.mxu0 0
    %363 = vmatprep.subr.bf16.mxu0 0
    %364 = vmatpush1.bf16.msra.mxu0 0
    %365 = vmatprep.subr.bf16.mxu0 0
    %366 = vmatpush1.bf16.msra.mxu0 0
    %367 = vmatprep.subr.bf16.mxu0 0
    %368 = vmatpush1.bf16.msra.mxu0 0
    %369 = vmatprep.subr.bf16.mxu0 0
    %370 = vmatpush1.bf16.msra.mxu0 0
    %371 = vmatprep.subr.bf16.mxu0 0
    %372 = vmatpush1.bf16.msra.mxu0 0
    %373 = vmatprep.subr.bf16.mxu0 0
    %374 = vmatpush1.bf16.msra.mxu0 0
    %375 = vmatprep.mubr.bf16.mxu0 0
    %376 = vmatmul.mubr.bf16.gmra.mrb[0].mxu0 %v271
    %v377 = vpop.f32.mrb[0].mxu0
    %v378 = vadd.f32 %v293, %v377
    %v379 = vpop.f32.mrb[0].mxu0
    %v380 = vpop.f32.mrb[0].mxu0
    %v381 = vpop.f32.mrb[0].mxu0
    %382 = vdwg.mxu0
    %v383 = vlaneseq
    %v384 = vand.u32 %v383, 127
    %vm385 = vcmp.lt.s32.totalorder %v384, 8
    %vm386 = vcmp.ge.s32.totalorder %v384, 40
    %vm387 = vcmp.lt.s32.totalorder %v384, 72
    %vm388 = vmand %vm386, %vm387
    %v389 = vsel %vm385, %v378, -inf
    %390 = vmax.xlane.f32.xlu0 %v389
    %v391 = vpop.xlane.xlu0 %390
    %v392 = vsub.f32 %v389, %v391
    %v393 = vmul.f32 %v392, 1.442695
    %v394 = vpow.pop %v393
    %395 = vadd.xlane.f32.xlu0 %v394
    %v396 = vpop.xlane.xlu0 %395
    %v397 = vrcp.pop %v396
    %v398 = vmul.f32 %v394, %v397
    %v399 = vmul.f32 %v378, 1.442695
    %v400 = vpow.pop %v399
    %v401 = vsel %vm388, %v400, %v378
    %v402 = vsel %vm385, %v398, %v401
    %v403 = vpack.c.bf16 %v402, %v402
    %404 = vst [vmem:[%s7] sm:$0xf] %v403
    // Predicated region
    $region46: #{mdn_forward.1} parent=1 // pred_check
      _
    $region47: #{mdn_forward.1} parent=1 // pred_check_branch
      %406 = sbr.rel (0) target = $region49
    $region48: #{mdn_forward.1} parent=1 // pred_region
      _
    $region49: #{mdn_forward.1} parent=1 // pred_fallthru
      _
    // Predicated region
    $region50: #{mdn_forward.1} parent=1 // pred_check
      _
    $region51: #{mdn_forward.1} parent=1 // pred_check_branch
      %408 = sbr.rel (0) target = $region53
    $region52: #{mdn_forward.1} parent=1 // pred_region
      _
    $region53: #{mdn_forward.1} parent=1 // pred_fallthru
      _
    %409 = vsyncpa [#allocation3], 1
    %410 = vsyncpa [#allocation5], 1
    %411 = vsyncpa [#allocation8], 1

</llo_original>
